<compile_context>
chip_gen: v6e
topology: v6e:2x2x1
jax: 0.10.0
libtpu: 0.0.40
codegen_flags: <defaults>
</compile_context>

<pallas_src>
import functools

import jax
import jax.numpy as jnp
from jax import lax
from jax.experimental import pallas as pl
from jax.experimental.pallas import tpu as pltpu

_LANE = 128      # vreg lane width (last dim)
_SUBLANE = 8     # vreg sublane count (second-to-last dim)
_EPS = 1e-5      # InstanceNorm1d default eps


def _round_up(n, m):
    return ((n + m - 1) // m) * m


def actor_forward_kernel(x_ref, w1_ref, w2_ref, bias_ref, o_ref, *,
                         hidden_size, action_size):
    # One batch row-tile resident in VMEM: two MXU matmuls + per-row norm + ReLU.
    x = x_ref[...].astype(w1_ref.dtype)                     # (TB, S) -> bf16

    # Linear 1: (TB, S) @ (S, Hp) + b1.  Padded H columns of w1 and padded b1
    # lanes are exact zeros, so padded lanes of h are exactly 0 and the real
    # lanes match the unpadded computation.
    b1 = bias_ref[0:1, :]                                    # (1, Hp) f32
    h = jnp.dot(x, w1_ref[...], preferred_element_type=jnp.float32) + b1

    # InstanceNorm1d on a 2-D (B, H) tensor == per-row normalization over the
    # hidden axis, no affine, eps=1e-5, biased variance.
    # TODO(synk): older PyTorch versions reject 2-D input to InstanceNorm1d; this
    # follows the modern unbatched (C, L) interpretation (per-row norm over H).
    hp = h.shape[-1]                                         # static padded width
    inv_h = jnp.float32(1.0 / hidden_size)
    # Padded lanes of h are exactly 0, so the sum over Hp equals the sum over H.
    mean = jnp.sum(h, axis=-1, keepdims=True) * inv_h
    hc = h - mean
    # Analytic correction: each of the (Hp - H) padded lanes contributes mean^2 to
    # sum(hc^2); subtract it instead of masking (no iota/compare/select needed).
    sumsq = jnp.sum(hc * hc, axis=-1, keepdims=True)
    var = (sumsq - jnp.float32(hp - hidden_size) * (mean * mean)) * inv_h
    hn = hc * lax.rsqrt(var + _EPS)                          # rsqrt -> EUP slot
    hn = jnp.maximum(hn, 0.0)                                # ReLU in f32
    # Padded lanes of hn carry ReLU(-mean * rsqrt(...)) != 0, but they multiply the
    # all-zero padded rows of w2, so the real outputs stay exact.

    # Linear 2: (TB, Hp) @ (Hp, A) + b2 -> lane-narrow (TB, A) output.
    b2 = bias_ref[1:2, :action_size]                         # (1, A) f32
    out = jnp.dot(hn.astype(w2_ref.dtype), w2_ref[...],
                  preferred_element_type=jnp.float32) + b2
    o_ref[...] = out.astype(o_ref.dtype)


def prepare_actor_params(w1, b1, w2, b2, *, param_dtype=jnp.bfloat16):
    """One-time weight preparation (call at init / after each soft update, NOT per step):
    pad the hidden axis to a multiple of 128 lanes, cast weights to bf16, and pack both
    biases into a single (2, Hp) f32 operand (row 0 = b1, row 1[:A] = b2).

    Weights are stored as (in_features, out_features), i.e. transposed vs. PyTorch.
    """
    S, H = w1.shape
    H2, A = w2.shape
    assert H2 == H
    Hp = _round_up(H, _LANE)
    w1p = jnp.zeros((S, Hp), param_dtype).at[:, :H].set(w1.astype(param_dtype))
    w2p = jnp.zeros((Hp, A), param_dtype).at[:H, :].set(w2.astype(param_dtype))
    bias = jnp.zeros((2, Hp), jnp.float32)
    bias = bias.at[0, :H].set(jnp.reshape(b1, (H,)).astype(jnp.float32))
    bias = bias.at[1, :A].set(jnp.reshape(b2, (A,)).astype(jnp.float32))
    return w1p, w2p, bias, H


def actor_net_forward(x, params):
    """x: (B, S); params from prepare_actor_params() -> (B, A)."""
    w1p, w2p, bias, H = params
    B, S = x.shape
    assert w1p.shape[0] == S, "state_size mismatch"
    Hp = w1p.shape[1]
    A = w2p.shape[1]

    # Batch row tiling: single grid step for small B; up to 512-row tiles for large B,
    # capped so the grid keeps >= 2 "parallel" steps (v7x has 2 TensorCores per chip).
    if B <= _LANE:
        TB = _round_up(B, _SUBLANE)
    else:
        TB = min(512, _round_up(-(-B // 2), _LANE))
    Bp = _round_up(B, TB)
    grid = (Bp // TB,)

    # Only the streaming input needs (possible) per-call padding, and only on the
    # batch axis; dtype cast to bf16 happens inside the kernel (no extra HBM pass).
    xp = x if Bp == B else jnp.zeros((Bp, S), x.dtype).at[:B, :].set(x)

    vmem = pltpu.MemorySpace.VMEM
    flops = 2 * Bp * S * Hp + 2 * Bp * Hp * A + 8 * Bp * Hp
    bytes_accessed = (xp.dtype.itemsize * Bp * S
                      + w1p.dtype.itemsize * S * Hp
                      + w2p.dtype.itemsize * Hp * A
                      + 4 * 2 * Hp
                      + x.dtype.itemsize * Bp * A)
    cost = pl.CostEstimate(flops=flops, transcendentals=Bp,
                           bytes_accessed=bytes_accessed)

    out = pl.pallas_call(
        functools.partial(actor_forward_kernel, hidden_size=H, action_size=A),
        out_shape=jax.ShapeDtypeStruct((Bp, A), x.dtype),
        grid=grid,
        in_specs=[
            pl.BlockSpec((TB, S), lambda i: (i, 0), memory_space=vmem),   # x row tile
            pl.BlockSpec((S, Hp), lambda i: (0, 0), memory_space=vmem),   # w1 (VMEM-resident)
            pl.BlockSpec((Hp, A), lambda i: (0, 0), memory_space=vmem),   # w2 (VMEM-resident)
            pl.BlockSpec((2, Hp), lambda i: (0, 0), memory_space=vmem),   # packed biases
        ],
        out_specs=pl.BlockSpec((TB, A), lambda i: (i, 0), memory_space=vmem),
        compiler_params=pltpu.CompilerParams(
            dimension_semantics=("parallel",),   # batch tiles split across TCs on v7x
        ),
        cost_estimate=cost,
    )(xp, w1p, w2p, bias)

    return out if Bp == B else out[:B]


def init_actor_params(key, state_size, hidden_size, action_size):
    """Deterministic init mimicking PyTorch Linear default (uniform +-1/sqrt(fan_in))."""
    k1, k2, k3, k4 = jax.random.split(key, 4)
    bound1 = 1.0 / (state_size ** 0.5)
    bound2 = 1.0 / (hidden_size ** 0.5)
    w1 = jax.random.uniform(k1, (state_size, hidden_size), jnp.float32, -bound1, bound1)
    b1 = jax.random.uniform(k2, (1, hidden_size), jnp.float32, -bound1, bound1)
    w2 = jax.random.uniform(k3, (hidden_size, action_size), jnp.float32, -bound2, bound2)
    b2 = jax.random.uniform(k4, (1, action_size), jnp.float32, -bound2, bound2)
    return w1, b1, w2, b2


def _reference_forward(x, w1, b1, w2, b2):
    h = x @ w1 + b1
    mean = jnp.mean(h, axis=-1, keepdims=True)
    var = jnp.mean(jnp.square(h - mean), axis=-1, keepdims=True)
    h = (h - mean) * lax.rsqrt(var + _EPS)
    h = jnp.maximum(h, 0.0)
    return h @ w2 + b2


if __name__ == "__main__":
    # Small shapes consistent with the module: batch=8, state=16, hidden=32, action=8.
    B, S, H, A = 8, 16, 32, 8
    key = jax.random.PRNGKey(0)
    kx, kp = jax.random.split(key)
    x = jax.random.normal(kx, (B, S), dtype=jnp.float32)
    w1, b1, w2, b2 = init_actor_params(kp, S, H, A)

    params = prepare_actor_params(w1, b1, w2, b2)   # one-time pad + bf16 cast
    out = actor_net_forward(x, params)
    out = jax.block_until_ready(out)

    ref = _reference_forward(x, w1, b1, w2, b2)     # pure-f32 reference
    assert out.shape == (B, A)
    # bf16 MXU operands => not bit-exact vs. the f32 reference; tolerance relaxed.
    assert jnp.allclose(out, ref, atol=2e-2, rtol=2e-2), "mismatch vs reference"

    print("KERNEL_OK")
</pallas_src>

<mosaic_0001>
module attributes {stable_mosaic.version = 11 : i64} {
  func.func @actor_forward_kernel(%arg0: i32, %arg1: memref<8x16xf32, #tpu.memory_space<vmem>>, %arg2: memref<16x128xbf16, #tpu.memory_space<vmem>>, %arg3: memref<128x8xbf16, #tpu.memory_space<vmem>>, %arg4: memref<2x128xf32, #tpu.memory_space<vmem>>, %arg5: memref<8x8xf32, #tpu.memory_space<vmem>>) attributes {dimension_semantics = [#tpu.dimension_semantics<parallel>], iteration_bounds = array<i64: 1>, scalar_prefetch = 0 : i64, scratch_operands = 0 : i64, tpu.core_type = #tpu.core_type<tc>, window_params = [{transform_indices = @transform_0, window_bounds = array<i64: 8, 16>}, {pipeline_mode = #tpu.pipeline_mode<synchronous>, transform_indices = @transform_1, window_bounds = array<i64: 16, 128>}, {pipeline_mode = #tpu.pipeline_mode<synchronous>, transform_indices = @transform_2, window_bounds = array<i64: 128, 8>}, {pipeline_mode = #tpu.pipeline_mode<synchronous>, transform_indices = @transform_3, window_bounds = array<i64: 2, 128>}, {transform_indices = @transform_4, window_bounds = array<i64: 8, 8>}]} {
    %c0 = arith.constant 0 : index
    %c0_0 = arith.constant 0 : index
    %0 = vector.load %arg1[%c0, %c0_0] : memref<8x16xf32, #tpu.memory_space<vmem>>, vector<8x16xf32>
    %1 = arith.truncf %0 : vector<8x16xf32> to vector<8x16xbf16>
    %c0_1 = arith.constant 0 : index
    %c0_2 = arith.constant 0 : index
    %2 = vector.load %arg4[%c0_1, %c0_2] : memref<2x128xf32, #tpu.memory_space<vmem>>, vector<1x128xf32>
    %c0_3 = arith.constant 0 : index
    %c0_4 = arith.constant 0 : index
    %3 = vector.load %arg2[%c0_3, %c0_4] : memref<16x128xbf16, #tpu.memory_space<vmem>>, vector<16x128xbf16>
    %cst = arith.constant dense<0.000000e+00> : vector<8x128xf32>
    %4 = tpu.matmul %1, %3, %cst {dimension_numbers = #tpu.dot_dimension_numbers<[1], [0], [0], [1], [0, 0, 1, 1], [], []>} : vector<8x16xbf16>, vector<16x128xbf16>, vector<8x128xf32> -> vector<8x128xf32>
    %5 = vector.broadcast %2 : vector<1x128xf32> to vector<8x128xf32>
    %6 = arith.addf %4, %5 : vector<8x128xf32>
    %cst_5 = arith.constant dense<0.000000e+00> : vector<8xf32>
    %7 = vector.multi_reduction <add>, %6, %cst_5 [1] : vector<8x128xf32> to vector<8xf32>
    %8 = vector.shape_cast %7 : vector<8xf32> to vector<8x1xf32>
    %cst_6 = arith.constant 3.125000e-02 : f32
    %9 = vector.broadcast %cst_6 : f32 to vector<8x1xf32>
    %10 = arith.mulf %8, %9 : vector<8x1xf32>
    %11 = vector.broadcast %10 : vector<8x1xf32> to vector<8x128xf32>
    %12 = arith.subf %6, %11 : vector<8x128xf32>
    %13 = arith.mulf %12, %12 : vector<8x128xf32>
    %cst_7 = arith.constant dense<0.000000e+00> : vector<8xf32>
    %14 = vector.multi_reduction <add>, %13, %cst_7 [1] : vector<8x128xf32> to vector<8xf32>
    %15 = vector.shape_cast %14 : vector<8xf32> to vector<8x1xf32>
    %16 = arith.mulf %10, %10 : vector<8x1xf32>
    %cst_8 = arith.constant 9.600000e+01 : f32
    %17 = vector.broadcast %cst_8 : f32 to vector<8x1xf32>
    %18 = arith.mulf %17, %16 : vector<8x1xf32>
    %19 = arith.subf %15, %18 : vector<8x1xf32>
    %cst_9 = arith.constant 3.125000e-02 : f32
    %20 = vector.broadcast %cst_9 : f32 to vector<8x1xf32>
    %21 = arith.mulf %19, %20 : vector<8x1xf32>
    %cst_10 = arith.constant 9.99999974E-6 : f32
    %22 = vector.broadcast %cst_10 : f32 to vector<8x1xf32>
    %23 = arith.addf %21, %22 : vector<8x1xf32>
    %24 = math.rsqrt %23 : vector<8x1xf32>
    %25 = vector.broadcast %24 : vector<8x1xf32> to vector<8x128xf32>
    %26 = arith.mulf %12, %25 : vector<8x128xf32>
    %cst_11 = arith.constant 0.000000e+00 : f32
    %27 = vector.broadcast %cst_11 : f32 to vector<8x128xf32>
    %28 = arith.maximumf %26, %27 : vector<8x128xf32>
    %c1 = arith.constant 1 : index
    %c0_12 = arith.constant 0 : index
    %29 = vector.load %arg4[%c1, %c0_12] : memref<2x128xf32, #tpu.memory_space<vmem>>, vector<1x8xf32>
    %30 = arith.truncf %28 : vector<8x128xf32> to vector<8x128xbf16>
    %c0_13 = arith.constant 0 : index
    %c0_14 = arith.constant 0 : index
    %31 = vector.load %arg3[%c0_13, %c0_14] : memref<128x8xbf16, #tpu.memory_space<vmem>>, vector<128x8xbf16>
    %cst_15 = arith.constant dense<0.000000e+00> : vector<8x8xf32>
    %32 = tpu.matmul %30, %31, %cst_15 {dimension_numbers = #tpu.dot_dimension_numbers<[1], [0], [0], [1], [0, 0, 1, 1], [], []>} : vector<8x128xbf16>, vector<128x8xbf16>, vector<8x8xf32> -> vector<8x8xf32>
    %33 = vector.broadcast %29 : vector<1x8xf32> to vector<8x8xf32>
    %34 = arith.addf %32, %33 : vector<8x8xf32>
    %c0_16 = arith.constant 0 : index
    %c0_17 = arith.constant 0 : index
    %35 = vector.load %arg5[%c0_16, %c0_17] : memref<8x8xf32, #tpu.memory_space<vmem>>, vector<8x8xf32>
    tpu.vector_store %arg5[%c0_16, %c0_17], %34 {strides = array<i32>} : memref<8x8xf32, #tpu.memory_space<vmem>>, vector<8x8xf32>,
    return
  }
  func.func @transform_0(%arg0: i32) -> (i32, i32) {
    %c0_i32 = arith.constant 0 : i32
    %c0_i32_0 = arith.constant 0 : i32
    return %arg0, %c0_i32 : i32, i32
  }
  func.func @transform_1(%arg0: i32) -> (i32, i32) {
    %c0_i32 = arith.constant 0 : i32
    %c0_i32_0 = arith.constant 0 : i32
    %c0_i32_1 = arith.constant 0 : i32
    return %c0_i32, %c0_i32_0 : i32, i32
  }
  func.func @transform_2(%arg0: i32) -> (i32, i32) {
    %c0_i32 = arith.constant 0 : i32
    %c0_i32_0 = arith.constant 0 : i32
    %c0_i32_1 = arith.constant 0 : i32
    return %c0_i32, %c0_i32_0 : i32, i32
  }
  func.func @transform_3(%arg0: i32) -> (i32, i32) {
    %c0_i32 = arith.constant 0 : i32
    %c0_i32_0 = arith.constant 0 : i32
    %c0_i32_1 = arith.constant 0 : i32
    return %c0_i32, %c0_i32_0 : i32, i32
  }
  func.func @transform_4(%arg0: i32) -> (i32, i32) {
    %c0_i32 = arith.constant 0 : i32
    %c0_i32_0 = arith.constant 0 : i32
    return %arg0, %c0_i32 : i32, i32
  }
}

</mosaic_0001>

<llo_original>
// kernel: tpu_custom_call.1
$region0: #{tpu_custom_call.1}
  #allocation0 [shape = 'u32[]', space=smem, size = 0x4, offset = 0x4, fixed_abs, tag = 'smem constant byte address 0x4 - core index']
  #allocation1 [shape = 'u32[144,128]{1,0:T(1,128)}', space=vmem, size = 0x12000, scoped, tag = 'internal scratch']
  %s0 = inlined_call_operand.vmem [shape: f32[8,16], index: 0, kind: input, shape index: {}]
  %s1 = inlined_call_operand.vmem [shape: bf16[16,128], index: 1, kind: input, shape index: {}]
  %s2 = inlined_call_operand.vmem [shape: bf16[128,8], index: 2, kind: input, shape index: {}]
  %s3 = inlined_call_operand.vmem [shape: f32[2,128], index: 3, kind: input, shape index: {}]
  %s4 = inlined_call_operand.hbm [shape: f32[8,8], index: 4, kind: output, shape index: {}]
  %s5 = sld [smem:[#allocation0]]
  $region26: #{tpu_custom_call.1} parent=0
    _
  %s7 = ssub.s32 1, %s5
  %s8 = scalar_select 0, %s7, %s5
  $region1: #{tpu_custom_call.1} parent=0
    #allocation2 [shape = 'u8[4096]{0}', space=vmem, size = 0x1000, scoped, tag = 'output window, operand 0, single buffered']
    #allocation3 [shape = 's32[1]{0}', space=sflag, size = 0x4, scoped, tag = 'scoped memory for tpu_custom_call.1']
    %9 = vsyncpa [#allocation3], 0
    // Predicated region
    $region2: #{tpu_custom_call.1} parent=1 // pred_check
      _
    $region3: #{tpu_custom_call.1} parent=1 // pred_check_branch
      %11 = sbr.rel (0) target = $region5
    $region4: #{tpu_custom_call.1} parent=1 // pred_region
      _
    $region5: #{tpu_custom_call.1} parent=1 // pred_fallthru
      _
    // Predicated region
    $region6: #{tpu_custom_call.1} parent=1 // pred_check
      _
    $region7: #{tpu_custom_call.1} parent=1 // pred_check_branch
      %13 = sbr.rel (0) target = $region9
    $region8: #{tpu_custom_call.1} parent=1 // pred_region
      _
    $region9: #{tpu_custom_call.1} parent=1 // pred_fallthru
      _
    // Predicated region
    $region10: #{tpu_custom_call.1} parent=1 // pred_check
      _
    $region11: #{tpu_custom_call.1} parent=1 // pred_check_branch
      %15 = sbr.rel (0) target = $region13
    $region12: #{tpu_custom_call.1} parent=1 // pred_region
      _
    $region13: #{tpu_custom_call.1} parent=1 // pred_fallthru
      _
    // Predicated region
    $region14: #{tpu_custom_call.1} parent=1 // pred_check
      _
    $region15: #{tpu_custom_call.1} parent=1 // pred_check_branch
      %17 = sbr.rel (0) target = $region17
    $region16: #{tpu_custom_call.1} parent=1 // pred_region
      _
    $region17: #{tpu_custom_call.1} parent=1 // pred_fallthru
      _
    %v19 = vld [vmem:[%s0] sm:$0xff]
    %v20 = vpack.c.bf16 %v19, %v19
    %v21 = vld [vmem:[%s3] sm:$0x1]
    %v22 = vld [vmem:[%s1] sm:$0xf]
    %v23 = vld [vmem:[%s1 + $0x4] sm:$0xf]
    %v24 = vlaneseq
    %v25 = vshrl.u32 %v24, 7
    %v26 = vsub.s32 0, %v25
    %v27 = vrot.slane %v21, %v26
    %v30 = vunpack.c.l.b16 %v22
    %v31 = vunpack.c.l.b16 %v23
    %v32 = vpack.c.b16 %v31, %v30
    %vm34 = vcmask 130048
    %v36 = vsel %vm34, %v20, 0
    %38 = vmatprep.subr.bf16.mxu0 0
    %39 = vmatpush1.bf16.msra.mxu0 0
    %40 = vmatprep.subr.bf16.mxu0 0
    %41 = vmatpush1.bf16.msra.mxu0 0
    %42 = vmatprep.subr.bf16.mxu0 0
    %43 = vmatpush1.bf16.msra.mxu0 0
    %44 = vmatprep.subr.bf16.mxu0 0
    %45 = vmatpush1.bf16.msra.mxu0 0
    %46 = vmatprep.subr.bf16.mxu0 0
    %47 = vmatpush1.bf16.msra.mxu0 0
    %48 = vmatprep.subr.bf16.mxu0 0
    %49 = vmatpush1.bf16.msra.mxu0 0
    %50 = vmatprep.subr.bf16.mxu0 0
    %51 = vmatpush1.bf16.msra.mxu0 0
    %52 = vmatprep.subr.bf16.mxu0 0
    %53 = vmatpush1.bf16.msra.mxu0 %v32
    %54 = vmatprep.subr.bf16.mxu0 0
    %55 = vmatpush2.bf16.msra.mxu0 0
    %56 = vmatprep.subr.bf16.mxu0 0
    %57 = vmatpush2.bf16.msra.mxu0 0
    %58 = vmatprep.subr.bf16.mxu0 0
    %59 = vmatpush2.bf16.msra.mxu0 0
    %60 = vmatprep.subr.bf16.mxu0 0
    %61 = vmatpush2.bf16.msra.mxu0 0
    %62 = vmatprep.subr.bf16.mxu0 0
    %63 = vmatpush2.bf16.msra.mxu0 0
    %64 = vmatprep.subr.bf16.mxu0 0
    %65 = vmatpush2.bf16.msra.mxu0 0
    %66 = vmatprep.subr.bf16.mxu0 0
    %67 = vmatpush2.bf16.msra.mxu0 0
    %68 = vmatprep.subr.bf16.mxu0 0
    %69 = vmatpush2.bf16.msra.mxu0 0
    %70 = vmatprep.mubr.bf16.mxu0 0
    %71 = vmatmul.mubr.bf16.gmra.mxu0 %v36
    %v72 = vpop.f32.mrf.mxu0
    %v73 = vadd.f32 %v27, %v72
    %v74 = vpop.f32.mrf.mxu0
    %v75 = vpop.f32.mrf.mxu0
    %v76 = vpop.f32.mrf.mxu0
    %77 = vdwg.mxu0
    %78 = vadd.xlane.f32.xlu0 %v73
    %v79 = vpop.xlane.xlu0 %78
    %v80 = vmul.f32 %v79, 0.03125
    %v81 = vsub.f32 %v73, %v80
    %v82 = vmul.f32 %v81, %v81
    %83 = vadd.xlane.f32.xlu0 %v82
    %v84 = vpop.xlane.xlu0 %83
    %v85 = vmul.f32 %v80, %v80
    %v86 = vmul.f32 %v85, 96.0
    %v87 = vsub.f32 %v84, %v86
    %v88 = vmul.f32 %v87, 0.03125
    %v89 = vadd.f32 %v88, 1e-05
    %v90 = vrsqrt.pop %v89
    %v91 = vmul.f32 %v81, %v90
    %v92 = vmax.f32 %v91, 0.0
    %v93 = vld [vmem:[%s3 + $0x1] sm:$0x1]
    %v94 = vpack.c.bf16 %v92, %v92
    %v95 = vld [vmem:[%s2] sm:$0xf]
    %v96 = vld [vmem:[%s2 + $0x4] sm:$0xf]
    %v97 = vld [vmem:[%s2 + $0x8] sm:$0xf]
    %v98 = vld [vmem:[%s2 + $0xc] sm:$0xf]
    %v99 = vld [vmem:[%s2 + $0x10] sm:$0xf]
    %v100 = vld [vmem:[%s2 + $0x14] sm:$0xf]
    %v101 = vld [vmem:[%s2 + $0x18] sm:$0xf]
    %v102 = vld [vmem:[%s2 + $0x1c] sm:$0xf]
    %v103 = vld [vmem:[%s2 + $0x20] sm:$0xf]
    %v104 = vld [vmem:[%s2 + $0x24] sm:$0xf]
    %v105 = vld [vmem:[%s2 + $0x28] sm:$0xf]
    %v106 = vld [vmem:[%s2 + $0x2c] sm:$0xf]
    %v107 = vld [vmem:[%s2 + $0x30] sm:$0xf]
    %v108 = vld [vmem:[%s2 + $0x34] sm:$0xf]
    %v109 = vld [vmem:[%s2 + $0x38] sm:$0xf]
    %v110 = vld [vmem:[%s2 + $0x3c] sm:$0xf]
    %v111 = vlaneseq
    %v112 = vshrl.u32 %v111, 7
    %v113 = vsub.s32 0, %v112
    %v114 = vrot.slane %v93, %v113
    %v131 = vunpack.c.l.b16 %v95
    %v132 = vunpack.c.l.b16 %v96
    %v133 = vunpack.c.l.b16 %v97
    %v134 = vunpack.c.l.b16 %v98
    %v135 = vunpack.c.l.b16 %v99
    %v136 = vunpack.c.l.b16 %v100
    %v137 = vunpack.c.l.b16 %v101
    %v138 = vunpack.c.l.b16 %v102
    %v139 = vunpack.c.l.b16 %v103
    %v140 = vunpack.c.l.b16 %v104
    %v141 = vunpack.c.l.b16 %v105
    %v142 = vunpack.c.l.b16 %v106
    %v143 = vunpack.c.l.b16 %v107
    %v144 = vunpack.c.l.b16 %v108
    %v145 = vunpack.c.l.b16 %v109
    %v146 = vunpack.c.l.b16 %v110
    %v147 = vpack.c.b16 %v132, %v131
    %v148 = vpack.c.b16 %v134, %v133
    %v149 = vpack.c.b16 %v136, %v135
    %v150 = vpack.c.b16 %v138, %v137
    %v151 = vpack.c.b16 %v140, %v139
    %v152 = vpack.c.b16 %v142, %v141
    %v153 = vpack.c.b16 %v144, %v143
    %v154 = vpack.c.b16 %v146, %v145
    %163 = vmatprep.subr.bf16.mxu0 0
    %164 = vmatpush1.bf16.msra.mxu0 %v154
    %165 = vmatprep.subr.bf16.mxu0 0
    %166 = vmatpush1.bf16.msra.mxu0 %v153
    %167 = vmatprep.subr.bf16.mxu0 0
    %168 = vmatpush1.bf16.msra.mxu0 %v152
    %169 = vmatprep.subr.bf16.mxu0 0
    %170 = vmatpush1.bf16.msra.mxu0 %v151
    %171 = vmatprep.subr.bf16.mxu0 0
    %172 = vmatpush1.bf16.msra.mxu0 %v150
    %173 = vmatprep.subr.bf16.mxu0 0
    %174 = vmatpush1.bf16.msra.mxu0 %v149
    %175 = vmatprep.subr.bf16.mxu0 0
    %176 = vmatpush1.bf16.msra.mxu0 %v148
    %177 = vmatprep.subr.bf16.mxu0 0
    %178 = vmatpush1.bf16.msra.mxu0 %v147
    %179 = vmatprep.subr.bf16.mxu0 0
    %180 = vmatpush2.bf16.msra.mxu0 0
    %181 = vmatprep.subr.bf16.mxu0 0
    %182 = vmatpush2.bf16.msra.mxu0 0
    %183 = vmatprep.subr.bf16.mxu0 0
    %184 = vmatpush2.bf16.msra.mxu0 0
    %185 = vmatprep.subr.bf16.mxu0 0
    %186 = vmatpush2.bf16.msra.mxu0 0
    %187 = vmatprep.subr.bf16.mxu0 0
    %188 = vmatpush2.bf16.msra.mxu0 0
    %189 = vmatprep.subr.bf16.mxu0 0
    %190 = vmatpush2.bf16.msra.mxu0 0
    %191 = vmatprep.subr.bf16.mxu0 0
    %192 = vmatpush2.bf16.msra.mxu0 0
    %193 = vmatprep.subr.bf16.mxu0 0
    %194 = vmatpush2.bf16.msra.mxu0 0
    %195 = vmatprep.mubr.bf16.mxu0 0
    %196 = vmatmul.mubr.bf16.gmra.mxu0 %v94
    %v197 = vpop.f32.mrf.mxu0
    %v198 = vadd.f32 %v114, %v197
    %v199 = vpop.f32.mrf.mxu0
    %v200 = vpop.f32.mrf.mxu0
    %v201 = vpop.f32.mrf.mxu0
    %202 = vdwg.mxu0
    %vm203 = vcmask 64512
    %204 = vst.msk [vmem:[#allocation2] sm:$0xff] %vm203, %v198
    // Predicated region
    $region18: #{tpu_custom_call.1} parent=1 // pred_check
      _
    $region19: #{tpu_custom_call.1} parent=1 // pred_check_branch
      %206 = sbr.rel (0) target = $region21
    $region20: #{tpu_custom_call.1} parent=1 // pred_region
      %s208 = ssub.s32 128, 128
      %209 = vsyncadd [#allocation3], %s208
      %s211 = sshll.u32 [#allocation2], 4
      %s212 = int_to_ptr.vmem [resolvable:$true] %s211
      %214 = dma.vmem_to_hbm [thread:$0]  %s212, 128, %s4, [#allocation3]
    $region21: #{tpu_custom_call.1} parent=1 // pred_fallthru
      _
    // Predicated region
    $region22: #{tpu_custom_call.1} parent=1 // pred_check
      _
    $region23: #{tpu_custom_call.1} parent=1 // pred_check_branch
      %216 = sbr.rel (0) target = $region25
    $region24: #{tpu_custom_call.1} parent=1 // pred_region
      %217 = dma.done [#allocation3], 128
    $region25: #{tpu_custom_call.1} parent=1 // pred_fallthru
      _
    %218 = vsyncpa [#allocation3], 1

</llo_original>
